<compile_context>
chip_gen: v5e
topology: v5e:2x2
jax: 0.10.0
libtpu: 0.0.40
codegen_flags: <defaults>
</compile_context>

<pallas_src>
import functools

import numpy as np
import jax
import jax.numpy as jnp
from jax.experimental import pallas as pl
from jax.experimental.pallas import tpu as pltpu


_TARGET_ROWS_PER_STEP = 512              # review: 256-1024 rows per grid step
_DMA_WINDOW = 16                         # in-flight row DMAs (shared sem pool)
_ONEHOT_MAX_VOCAB = 2048                 # beyond this, one-hot stops being cheap
_ONEHOT_BYTES_BUDGET = 2 * 1024 * 1024   # per-step one-hot temporary budget


def _sublane_multiple(dtype):
    """Minimum row multiple so blocks respect sublane packing for the dtype."""
    return {4: 8, 2: 16, 1: 32}.get(jnp.dtype(dtype).itemsize, 8)


def _pick_rows_per_step(n_pad, sub, max_rows):
    """Largest multiple of `sub` that divides n_pad and is <= max_rows."""
    best = sub
    r = sub
    limit = min(max_rows, n_pad)
    while r <= limit:
        if n_pad % r == 0:
            best = r
        r += sub
    return best


def _vmem_capacity_bytes():
    try:
        return int(pltpu.get_tpu_info().vmem_capacity_bytes)
    except Exception:
        return 64 * 1024 * 1024          # conservative: v7x has 64 MiB per TC


def _resident_gather_kernel(idx_ref, w_ref, o_ref):
    """VMEM-resident table: gather = one_hot(idx) @ table on the MXU.

    idx_ref : VMEM (rows, 1) int32 block of remapped indices
    w_ref   : VMEM (vocab, dim) full resident table (constant index_map)
    o_ref   : VMEM (rows, dim) output block
    """
    rows = o_ref.shape[0]
    vocab = w_ref.shape[0]
    lane_ids = jax.lax.broadcasted_iota(jnp.int32, (rows, vocab), 1)
    onehot = (idx_ref[...] == lane_ids).astype(w_ref.dtype)
    # TODO(synk): for embed_dim < 128 a lane-dense grouped output block
    # (128 // dim rows packed per output row) would avoid masked vst stores.
    o_ref[...] = jnp.dot(
        onehot, w_ref[...], preferred_element_type=jnp.float32
    ).astype(o_ref.dtype)


def _dma_gather_kernel(idx_ref, w_hbm, o_ref, sems, *, window):
    """HBM table: per-row DMAs straight into the pipelined output block.

    idx_ref : SMEM (rows,) int32 block of remapped indices
    w_hbm   : ANY  (vocab, dim) embedding table, stays in HBM
    o_ref   : VMEM (rows, dim) output block (direct DMA destination)
    sems    : shared pool of `window` DMA semaphores
    """
    rows = o_ref.shape[0]

    def issue(r):
        row = idx_ref[r]
        pltpu.make_async_copy(
            w_hbm.at[pl.ds(row, 1)],
            o_ref.at[pl.ds(r, 1)],
            sems.at[r % window],
        ).start()

    # Prime the in-flight window (small static unroll).
    for r in range(min(window, rows)):
        issue(r)

    # Rolling window: wait for row r, immediately reuse its semaphore slot for
    # row r + window, keeping `window` row copies in flight to cover HBM latency.
    @pl.loop(0, rows)
    def _(r):
        pltpu.make_async_copy(
            w_hbm.at[pl.ds(0, 1)],          # same byte count as the issued copy
            o_ref.at[pl.ds(r, 1)],
            sems.at[r % window],
        ).wait()

        @pl.when(r + window < rows)
        def _():
            issue(r + window)


def features_embedding(x, weight, offsets, *, force_hbm_gather=False):
    """FeaturesEmbedding.forward: weight[x + offsets] -> (batch, fields, dim)."""
    batch, num_fields = x.shape
    vocab, dim = weight.shape
    itemsize = jnp.dtype(weight.dtype).itemsize

    # Index remap (x + offsets); tiny relative to the gather itself.
    idx = (x.astype(jnp.int32) + offsets.astype(jnp.int32)[None, :]).reshape(-1)

    n = batch * num_fields
    sub = _sublane_multiple(weight.dtype)
    n_pad = pl.cdiv(n, sub) * sub            # sublane-aligned row count
    if n_pad != n:
        # TODO(synk): a masked final block would avoid the post-kernel slice copy.
        idx = jnp.pad(idx, (0, n_pad - n))   # row 0 is always a valid row

    vmem_cap = _vmem_capacity_bytes()
    table_bytes = vocab * dim * itemsize

    use_resident = (
        not force_hbm_gather
        and vocab <= _ONEHOT_MAX_VOCAB
        and table_bytes <= int(0.4 * vmem_cap)
    )

    if use_resident:
        max_rows = max(sub, (_ONEHOT_BYTES_BUDGET // (4 * vocab)) // sub * sub)
        rows = _pick_rows_per_step(n_pad, sub,
                                   min(_TARGET_ROWS_PER_STEP, max_rows))
        grid = (n_pad // rows,)

        # Resident table + double-buffered idx/out blocks + one-hot temporaries.
        vmem_need = (table_bytes
                     + 2 * rows * (dim * itemsize + 4)
                     + rows * vocab * 4
                     + (2 << 20))
        vmem_limit = int(min(0.9 * vmem_cap, max(vmem_need, 16 << 20)))

        out_flat = pl.pallas_call(
            _resident_gather_kernel,
            out_shape=jax.ShapeDtypeStruct((n_pad, dim), weight.dtype),
            grid=grid,
            in_specs=[
                pl.BlockSpec((rows, 1), lambda g: (g, 0)),     # indices
                pl.BlockSpec((vocab, dim), lambda g: (0, 0)),  # resident table
            ],
            out_specs=pl.BlockSpec((rows, dim), lambda g: (g, 0)),
            compiler_params=pltpu.CompilerParams(
                dimension_semantics=("parallel",),
                vmem_limit_bytes=vmem_limit,
            ),
            cost_estimate=pl.CostEstimate(
                flops=2 * n_pad * vocab * dim,
                transcendentals=0,
                bytes_accessed=table_bytes + n_pad * (4 + dim * itemsize),
            ),
        )(idx.reshape(n_pad, 1), weight)
    else:
        rows = _pick_rows_per_step(n_pad, sub, _TARGET_ROWS_PER_STEP)
        grid = (n_pad // rows,)
        window = min(_DMA_WINDOW, rows)

        kernel = functools.partial(_dma_gather_kernel, window=window)
        out_flat = pl.pallas_call(
            kernel,
            out_shape=jax.ShapeDtypeStruct((n_pad, dim), weight.dtype),
            grid=grid,
            in_specs=[
                pl.BlockSpec((rows,), lambda g: (g,),
                             memory_space=pltpu.MemorySpace.SMEM),  # indices
                pl.BlockSpec(memory_space=pl.ANY),                  # table in HBM
            ],
            out_specs=pl.BlockSpec((rows, dim), lambda g: (g, 0)),
            scratch_shapes=[pltpu.SemaphoreType.DMA((window,))],
            compiler_params=pltpu.CompilerParams(
                dimension_semantics=("parallel",),
            ),
            cost_estimate=pl.CostEstimate(
                flops=0,
                transcendentals=0,
                bytes_accessed=n_pad * (4 + 2 * dim * itemsize),
            ),
        )(idx, weight)

    out_flat = out_flat[:n] if n_pad != n else out_flat
    return out_flat.reshape(batch, num_fields, dim)


def features_embedding_ref(x, weight, offsets):
    """Pure-JAX reference matching the PyTorch semantics."""
    idx = x.astype(jnp.int32) + offsets.astype(jnp.int32)[None, :]
    return weight[idx]


if __name__ == "__main__":
    key = jax.random.PRNGKey(0)
    field_dims = (3, 4, 5, 4)            # sum(field_dims) = 16 table rows
    embed_dim = 32
    batch = 2
    num_fields = len(field_dims)
    vocab = int(sum(field_dims))

    k_w, k_x = jax.random.split(key)

    # xavier_uniform-style table init (init scheme does not affect forward math).
    limit = float(np.sqrt(6.0 / (vocab + embed_dim)))
    weight = jax.random.uniform(
        k_w, (vocab, embed_dim), jnp.float32, minval=-limit, maxval=limit
    )

    # Per-field categorical ids in [0, field_dims[f]).
    maxvals = jnp.array(field_dims, dtype=jnp.int32)[None, :]
    x = jax.random.randint(k_x, (batch, num_fields), 0, 10_000, jnp.int32) % maxvals

    offsets = jnp.array((0, *np.cumsum(field_dims)[:-1]), dtype=jnp.int32)

    out = features_embedding(x, weight, offsets)   # resident (one-hot MXU) path
    out = jax.block_until_ready(out)

    ref = features_embedding_ref(x, weight, offsets)
    assert out.shape == (batch, num_fields, embed_dim), out.shape
    assert jnp.allclose(out, ref, atol=1e-6, rtol=1e-6), "mismatch vs reference"

    print("KERNEL_OK")
</pallas_src>

<mosaic_0001>
module attributes {stable_mosaic.version = 11 : i64} {
  func.func @_resident_gather_kernel(%arg0: i32, %arg1: memref<8x1xi32, #tpu.memory_space<vmem>>, %arg2: memref<16x32xf32, #tpu.memory_space<vmem>>, %arg3: memref<8x32xf32, #tpu.memory_space<vmem>>) attributes {dimension_semantics = [#tpu.dimension_semantics<parallel>], iteration_bounds = array<i64: 1>, scalar_prefetch = 0 : i64, scratch_operands = 0 : i64, tpu.core_type = #tpu.core_type<tc>, window_params = [{transform_indices = @transform_0, window_bounds = array<i64: 8, 1>}, {pipeline_mode = #tpu.pipeline_mode<synchronous>, transform_indices = @transform_1, window_bounds = array<i64: 16, 32>}, {transform_indices = @transform_2, window_bounds = array<i64: 8, 32>}]} {
    %0 = tpu.iota {dimensions = array<i32: 1>} : vector<8x16xi32>
    %c0 = arith.constant 0 : index
    %c0_0 = arith.constant 0 : index
    %1 = vector.load %arg1[%c0, %c0_0] : memref<8x1xi32, #tpu.memory_space<vmem>>, vector<8x1xi32>
    %2 = vector.broadcast %1 : vector<8x1xi32> to vector<8x16xi32>
    %3 = arith.cmpi eq, %2, %0 : vector<8x16xi32>
    %4 = arith.extui %3 : vector<8x16xi1> to vector<8x16xi32>
    %5 = arith.sitofp %4 : vector<8x16xi32> to vector<8x16xf32>
    %c0_1 = arith.constant 0 : index
    %c0_2 = arith.constant 0 : index
    %6 = vector.load %arg2[%c0_1, %c0_2] : memref<16x32xf32, #tpu.memory_space<vmem>>, vector<16x32xf32>
    %cst = arith.constant dense<0.000000e+00> : vector<8x32xf32>
    %7 = tpu.matmul %5, %6, %cst {dimension_numbers = #tpu.dot_dimension_numbers<[1], [0], [0], [1], [0, 0, 1, 1], [], []>} : vector<8x16xf32>, vector<16x32xf32>, vector<8x32xf32> -> vector<8x32xf32>
    %c0_3 = arith.constant 0 : index
    %c0_4 = arith.constant 0 : index
    %8 = vector.load %arg3[%c0_3, %c0_4] : memref<8x32xf32, #tpu.memory_space<vmem>>, vector<8x32xf32>
    tpu.vector_store %arg3[%c0_3, %c0_4], %7 {strides = array<i32>} : memref<8x32xf32, #tpu.memory_space<vmem>>, vector<8x32xf32>,
    return
  }
  func.func @transform_0(%arg0: i32) -> (i32, i32) {
    %c0_i32 = arith.constant 0 : i32
    %c0_i32_0 = arith.constant 0 : i32
    return %arg0, %c0_i32 : i32, i32
  }
  func.func @transform_1(%arg0: i32) -> (i32, i32) {
    %c0_i32 = arith.constant 0 : i32
    %c0_i32_0 = arith.constant 0 : i32
    %c0_i32_1 = arith.constant 0 : i32
    return %c0_i32, %c0_i32_0 : i32, i32
  }
  func.func @transform_2(%arg0: i32) -> (i32, i32) {
    %c0_i32 = arith.constant 0 : i32
    %c0_i32_0 = arith.constant 0 : i32
    return %arg0, %c0_i32 : i32, i32
  }
}

</mosaic_0001>

<llo_original>
// kernel: tpu_custom_call.1
$region0: #{tpu_custom_call.1}
  #allocation0 [shape = 'u32[]', space=smem, size = 0x4, offset = 0x4, fixed_abs, tag = 'smem constant byte address 0x4 - core index']
  #allocation1 [shape = 'u32[72,128]{1,0:T(1,128)}', space=vmem, size = 0x9000, scoped, tag = 'internal scratch']
  %s0 = inlined_call_operand.vmem [shape: s32[8,1], index: 0, kind: input, shape index: {}]
  %s1 = inlined_call_operand.hbm [shape: f32[16,32], index: 1, kind: input, shape index: {}]
  %s2 = inlined_call_operand.hbm [shape: f32[8,32], index: 2, kind: output, shape index: {}]
  %s3 = sld [smem:[#allocation0]]
  $region22: #{tpu_custom_call.1} parent=0
    _
  %s5 = ssub.s32 1, %s3
  %s6 = scalar_select 0, %s5, %s3
  $region1: #{tpu_custom_call.1} parent=0
    #allocation2 [shape = 'u8[8192]{0}', space=vmem, size = 0x2000, scoped, tag = 'input window, operand 1, single buffered']
    #allocation3 [shape = 's32[1]{0}', space=sflag, size = 0x4, scoped, tag = 'scoped memory for tpu_custom_call.1']
    #allocation4 [shape = 's32[1]{0}', space=sflag, size = 0x4, scoped, tag = 'scoped memory for tpu_custom_call.1']
    #allocation5 [shape = 'u8[4096]{0}', space=vmem, size = 0x1000, scoped, tag = 'output window, operand 0, single buffered']
    %7 = vsyncpa [#allocation3], 0
    %8 = vsyncpa [#allocation4], 0
    // Predicated region
    $region2: #{tpu_custom_call.1} parent=1 // pred_check
      _
    $region3: #{tpu_custom_call.1} parent=1 // pred_check_branch
      %10 = sbr.rel (0) target = $region5
    $region4: #{tpu_custom_call.1} parent=1 // pred_region
      _
    $region5: #{tpu_custom_call.1} parent=1 // pred_fallthru
      _
    // Predicated region
    $region6: #{tpu_custom_call.1} parent=1 // pred_check
      _
    $region7: #{tpu_custom_call.1} parent=1 // pred_check_branch
      %12 = sbr.rel (0) target = $region9
    $region8: #{tpu_custom_call.1} parent=1 // pred_region
      %14 = vsyncadd [#allocation3], 0
      %s15 = sshll.u32 %s1, 4
      %s16 = int_to_ptr.hbm [resolvable:$true] %s15
      %s17 = sshll.u32 [#allocation2], 4
      %s18 = int_to_ptr.vmem [resolvable:$true] %s17
      %23 = dma.hbm_to_vmem [thread:$0]  %s16, 256, %s18, [#allocation3], 128, 128, 8
    $region9: #{tpu_custom_call.1} parent=1 // pred_fallthru
      _
    // Predicated region
    $region10: #{tpu_custom_call.1} parent=1 // pred_check
      _
    $region11: #{tpu_custom_call.1} parent=1 // pred_check_branch
      %25 = sbr.rel (0) target = $region13
    $region12: #{tpu_custom_call.1} parent=1 // pred_region
      %27 = dma.done [#allocation3], 256
    $region13: #{tpu_custom_call.1} parent=1 // pred_fallthru
      _
    %v28 = vlaneseq
    %v29 = vand.u32 %v28, 127
    %v30 = vld [vmem:[%s0] sm:$0xff]
    %31 = vset.pattern.permute.xlu0 0
    %32 = vperm.xlu0 %31, %v30
    %v33 = vpop.permute.xlu0 %32
    %vm34 = vcmp.eq.s32.totalorder %v33, %v29
    %v35 = vsel %vm34, 1, 0
    %v36 = vcvt.s32.f32 %v35
    %v37 = vld [vmem:[#allocation2] sm:$0xff]
    %v38 = vld [vmem:[#allocation2 + $0x8] sm:$0xff]
    %vm39 = vcmask 130048
    %v41 = vsel %vm39, %v36, 0
    %43 = vmatpush.msra.mxu0 0.0
    %44 = vmatpush.msra.mxu0 0.0
    %45 = vmatpush.msra.mxu0 0.0
    %46 = vmatpush.msra.mxu0 0.0
    %47 = vmatpush.msra.mxu0 0.0
    %48 = vmatpush.msra.mxu0 0.0
    %49 = vmatpush.msra.mxu0 0.0
    %50 = vmatpush.msra.mxu0 0.0
    %51 = vmatpush.msra.mxu0 0.0
    %52 = vmatpush.msra.mxu0 0.0
    %53 = vmatpush.msra.mxu0 0.0
    %54 = vmatpush.msra.mxu0 0.0
    %55 = vmatpush.msra.mxu0 0.0
    %56 = vmatpush.msra.mxu0 0.0
    %57 = vmatpush.msra.mxu0 %v38
    %58 = vmatpush.msra.mxu0 %v37
    %59 = vmatmul.f32.gmra.mxu0 %v41
    %v60 = vpop.f32.mrf.mxu0
    %v61 = vadd.f32 0.0, %v60
    %62 = vdwg.mxu0
    %vm63 = vcmask 261120
    %64 = vst.msk [vmem:[#allocation5] sm:$0xff] %vm63, %v61
    // Predicated region
    $region14: #{tpu_custom_call.1} parent=1 // pred_check
      _
    $region15: #{tpu_custom_call.1} parent=1 // pred_check_branch
      %66 = sbr.rel (0) target = $region17
    $region16: #{tpu_custom_call.1} parent=1 // pred_region
      %68 = vsyncadd [#allocation4], 0
      %s70 = sshll.u32 [#allocation5], 4
      %s71 = int_to_ptr.vmem [resolvable:$true] %s70
      %s72 = sshll.u32 %s2, 4
      %s73 = int_to_ptr.hbm [resolvable:$true] %s72
      %75 = dma.vmem_to_hbm [thread:$0]  %s71, 128, %s73, [#allocation4]
    $region17: #{tpu_custom_call.1} parent=1 // pred_fallthru
      _
    // Predicated region
    $region18: #{tpu_custom_call.1} parent=1 // pred_check
      _
    $region19: #{tpu_custom_call.1} parent=1 // pred_check_branch
      %77 = sbr.rel (0) target = $region21
    $region20: #{tpu_custom_call.1} parent=1 // pred_region
      %79 = dma.done [#allocation4], 128
    $region21: #{tpu_custom_call.1} parent=1 // pred_fallthru
      _
    %80 = vsyncpa [#allocation3], 1
    %81 = vsyncpa [#allocation4], 1

</llo_original>
